<compile_context>
chip_gen: v7x
topology: tpu7x:2x2x1
jax: 0.10.0
libtpu: 0.0.40
codegen_flags: <defaults>
</compile_context>

<pallas_src>
import functools

import jax
import jax.numpy as jnp
from jax.experimental import pallas as pl
from jax.experimental.pallas import tpu as pltpu


# ---------------------------------------------------------------------------
# Small helpers.
# ---------------------------------------------------------------------------
def _cdiv(a, b):
    return -(-a // b)


def _round_up(x, m):
    return _cdiv(x, m) * m


def _pick_spatial_tile(s, n):
    """128-aligned spatial tile; prefer big tiles, but keep >=8 grid steps."""
    if s <= 128:
        return s                      # block dim == full dim is always legal
    tm = 128
    for cand in (1024, 512, 256, 128):
        if cand <= _round_up(s, 128):
            tm = cand
            break
    while tm > 128 and n * _cdiv(s, tm) < 8:
        tm //= 2
    return tm


def _pick_channel_block(c, n, h, w, scale, in_bytes, out_bytes,
                        budget_bytes=16 * 1024 * 1024):
    """Channel block for the upsample kernel from an explicit VMEM budget."""
    hout, wout = h * scale, w * scale
    per_chan = (2 * h * w * in_bytes          # input block, double-buffered
                + 2 * hout * wout * out_bytes  # output block, double-buffered
                + h * w * (4 + 2)              # x (f32 transpose) + bf16 copy
                + w * hout * (4 + 4 + 2)       # r f32, r transposed f32 + bf16
                + hout * wout * 4)             # matmul result before store
    c_budget = max(1, budget_bytes // per_chan)
    # Keep enough grid steps to feed both v7x TensorCores.
    blocks_per_n = max(1, _cdiv(8, n))
    c_par = max(1, _cdiv(c, blocks_per_n))
    return max(1, min(c_budget, c_par, 128, c))


# ---------------------------------------------------------------------------
# Kernel 1: fused Linear + LayerNorm over the channel axis, NCHW layout.
# ---------------------------------------------------------------------------
def _linear_ln_kernel(x_ref, w_ref, b_ref, g_ref, beta_ref, o_ref, *, eps):
    # x_ref: (1, Cin, tm) f32 spatial slab; w_ref: (Cout, Cin) bf16;
    # b/g/beta: (Cout, 1) f32; o_ref: (1, Cout, tm) bf16.
    x = x_ref[0].astype(jnp.bfloat16)                                # (Cin, tm)
    y = jnp.dot(w_ref[...], x, preferred_element_type=jnp.float32)  # (Cout, tm) f32
    y = y + b_ref[...]
    # LayerNorm over channels (== channels_last F.layer_norm, biased var), f32.
    u = jnp.mean(y, axis=0, keepdims=True)                          # (1, tm)
    d = y - u
    var = jnp.mean(d * d, axis=0, keepdims=True)
    yn = d * jax.lax.rsqrt(var + eps)
    o_ref[0] = (yn * g_ref[...] + beta_ref[...]).astype(o_ref.dtype)


def linear_layernorm_nchw(x3, lin_w, bias, gamma, beta, *, eps=1e-6, tm=512,
                          out_dtype=jnp.bfloat16):
    """x3: (N, Cin, S) channels-first; lin_w: (Cout, Cin) (PyTorch layout).

    Returns (N, Cout, S) = LayerNorm(Linear(x)) per spatial position, bf16.
    """
    N, Cin, S = x3.shape
    Cout = lin_w.shape[0]

    w_bf = lin_w.astype(jnp.bfloat16)
    b2 = bias.reshape(Cout, 1).astype(jnp.float32)
    g2 = gamma.reshape(Cout, 1).astype(jnp.float32)
    beta2 = beta.reshape(Cout, 1).astype(jnp.float32)

    return pl.pallas_call(
        functools.partial(_linear_ln_kernel, eps=eps),
        out_shape=jax.ShapeDtypeStruct((N, Cout, S), out_dtype),
        grid_spec=pltpu.PrefetchScalarGridSpec(
            num_scalar_prefetch=0,
            grid=(N, _cdiv(S, tm)),          # boundary block masked, no pad/slice
            in_specs=[
                pl.BlockSpec((1, Cin, tm), lambda n, i: (n, 0, i)),
                pl.BlockSpec((Cout, Cin), lambda n, i: (0, 0)),
                pl.BlockSpec((Cout, 1), lambda n, i: (0, 0)),
                pl.BlockSpec((Cout, 1), lambda n, i: (0, 0)),
                pl.BlockSpec((Cout, 1), lambda n, i: (0, 0)),
            ],
            out_specs=pl.BlockSpec((1, Cout, tm), lambda n, i: (n, 0, i)),
        ),
        compiler_params=pltpu.CompilerParams(
            dimension_semantics=("parallel", "parallel"),
            vmem_limit_bytes=48 * 1024 * 1024),
    )(x3, w_bf, b2, g2, beta2)


# ---------------------------------------------------------------------------
# Kernel 2: separable bilinear upsample as two wide MXU matmuls per block.
# ---------------------------------------------------------------------------
def _upsample_kernel(img_ref, aht_ref, awt_ref, o_ref):
    # img_ref: (1, Cb, H, W) bf16; aht_ref: (H, Hout) bf16; awt_ref: (W, Wout) bf16;
    # o_ref: (1, Cb, Hout, Wout).
    x = img_ref[0]                                   # (Cb, H, W)
    cb, h, w = x.shape
    hout = aht_ref.shape[1]
    wout = awt_ref.shape[1]

    # Row (H) resample: one wide 2-D matmul with M = Cb*W.
    xt = jnp.swapaxes(x.astype(jnp.float32), 1, 2)   # (Cb, W, H), minor-dims transpose
    xt = xt.reshape(cb * w, h).astype(jnp.bfloat16)
    r = jnp.dot(xt, aht_ref[...],
                preferred_element_type=jnp.float32)  # (Cb*W, Hout) f32

    # Column (W) resample: one wide 2-D matmul with M = Cb*Hout.
    rt = jnp.swapaxes(r.reshape(cb, w, hout), 1, 2)  # (Cb, Hout, W)
    rt = rt.reshape(cb * hout, w).astype(jnp.bfloat16)
    out = jnp.dot(rt, awt_ref[...],
                  preferred_element_type=jnp.float32)  # (Cb*Hout, Wout) f32

    o_ref[0] = out.reshape(cb, hout, wout).astype(o_ref.dtype)


def _interp_matrix(out_size, in_size, scale):
    """Interpolation matrix matching torch Upsample(bilinear, align_corners=False)."""
    i = jnp.arange(out_size, dtype=jnp.float32)
    src = (i + 0.5) / float(scale) - 0.5
    src = jnp.maximum(src, 0.0)                  # torch clamps the lower bound only
    i0 = jnp.floor(src).astype(jnp.int32)
    i1 = jnp.minimum(i0 + 1, in_size - 1)
    w1 = src - i0.astype(jnp.float32)
    w0 = 1.0 - w1
    A = jnp.zeros((out_size, in_size), dtype=jnp.float32)
    A = A.at[jnp.arange(out_size), i0].add(w0)
    A = A.at[jnp.arange(out_size), i1].add(w1)
    return A


def bilinear_upsample_nchw(y, scale, *, out_dtype=jnp.float32):
    """y: (N, C, H, W) -> (N, C, H*scale, W*scale)."""
    N, C, H, W = y.shape
    Hout, Wout = H * scale, W * scale
    # Pass the interp matrices pre-transposed (and bf16: 0.25/0.75 are exact).
    AhT = _interp_matrix(Hout, H, scale).T.astype(jnp.bfloat16)   # (H, Hout)
    AwT = _interp_matrix(Wout, W, scale).T.astype(jnp.bfloat16)   # (W, Wout)

    c_blk = _pick_channel_block(
        C, N, H, W, scale,
        in_bytes=y.dtype.itemsize,
        out_bytes=jnp.dtype(out_dtype).itemsize)

    return pl.pallas_call(
        _upsample_kernel,
        out_shape=jax.ShapeDtypeStruct((N, C, Hout, Wout), out_dtype),
        grid_spec=pltpu.PrefetchScalarGridSpec(
            num_scalar_prefetch=0,
            grid=(N, _cdiv(C, c_blk)),       # cdiv channel tiling, boundary masked
            in_specs=[
                pl.BlockSpec((1, c_blk, H, W), lambda n, j: (n, j, 0, 0)),
                pl.BlockSpec((H, Hout), lambda n, j: (0, 0)),
                pl.BlockSpec((W, Wout), lambda n, j: (0, 0)),
            ],
            out_specs=pl.BlockSpec((1, c_blk, Hout, Wout),
                                   lambda n, j: (n, j, 0, 0)),
        ),
        compiler_params=pltpu.CompilerParams(
            dimension_semantics=("parallel", "parallel"),
            vmem_limit_bytes=48 * 1024 * 1024),
    )(y, AhT, AwT)


# ---------------------------------------------------------------------------
# Full module forward.
# ---------------------------------------------------------------------------
def upsample_convnext_forward(x_nchw, params, ratio):
    """x_nchw: (N, Cin, H, W) float32 -> (N, Cout, H*2**ratio, W*2**ratio)."""
    N, Cin, H, W = x_nchw.shape
    lin_w = params["lin_w"]        # (Cout, Cin)  -- PyTorch Linear convention
    lin_b = params["lin_b"]        # (Cout,)
    ln_g = params["ln_g"]          # (Cout,)
    ln_b = params["ln_b"]          # (Cout,)
    Cout = lin_w.shape[0]

    S = H * W
    tm = _pick_spatial_tile(S, N)

    x3 = x_nchw.reshape(N, Cin, S)                  # free reshape, stays NCHW
    y3 = linear_layernorm_nchw(x3, lin_w, lin_b, ln_g, ln_b, eps=1e-6, tm=tm)
    y = y3.reshape(N, Cout, H, W)                   # bf16, already NCHW; no copies

    scale = 2 ** ratio
    return bilinear_upsample_nchw(y, scale, out_dtype=x_nchw.dtype)


# ---------------------------------------------------------------------------
# Pure-JAX reference (for the sanity check in the demo).
# ---------------------------------------------------------------------------
def _reference_forward(x, params, ratio):
    lin_w, lin_b = params["lin_w"], params["lin_b"]
    g, b = params["ln_g"], params["ln_b"]
    xl = jnp.transpose(x, (0, 2, 3, 1))
    y = jnp.einsum('nhwc,oc->nhwo', xl, lin_w, precision='highest') + lin_b
    u = jnp.mean(y, axis=-1, keepdims=True)
    v = jnp.mean((y - u) ** 2, axis=-1, keepdims=True)
    y = (y - u) * jax.lax.rsqrt(v + 1e-6) * g + b
    y = jnp.transpose(y, (0, 3, 1, 2))
    scale = 2 ** ratio
    _, _, H, W = y.shape
    Ah = _interp_matrix(H * scale, H, scale)
    Aw = _interp_matrix(W * scale, W, scale)
    t = jnp.einsum('oh,nchw->ncow', Ah, y, precision='highest')
    return jnp.einsum('vw,ncow->ncov', Aw, t, precision='highest')


if __name__ == "__main__":
    # Small deterministic demo: N=2, Cin=4, H=W=16, Cout=8, ratio=1 (scale 2).
    N, Cin, H, W = 2, 4, 16, 16
    Cout = 8
    ratio = 1

    key = jax.random.PRNGKey(0)
    kx, kw, kb = jax.random.split(key, 3)

    x = jax.random.normal(kx, (N, Cin, H, W), dtype=jnp.float32)
    params = {
        "lin_w": jax.random.normal(kw, (Cout, Cin), dtype=jnp.float32) * 0.1,
        "lin_b": jax.random.normal(kb, (Cout,), dtype=jnp.float32) * 0.1,
        "ln_g": jnp.ones((Cout,), dtype=jnp.float32),
        "ln_b": jnp.zeros((Cout,), dtype=jnp.float32),
    }

    fwd = jax.jit(lambda xx, pp: upsample_convnext_forward(xx, pp, ratio))
    out = jax.block_until_ready(fwd(x, params))

    scale = 2 ** ratio
    assert out.shape == (N, Cout, H * scale, W * scale), out.shape

    ref = jax.block_until_ready(_reference_forward(x, params, ratio))
    err = float(jnp.max(jnp.abs(out - ref)))
    assert err < 5e-2, f"max abs error {err}"
    print("KERNEL_OK")
</pallas_src>

<mosaic_0001>
module attributes {stable_mosaic.version = 11 : i64} {
  func.func private @main(%arg0: i32) attributes {dimension_semantics = [#tpu.dimension_semantics<core_parallel>], iteration_bounds = array<i64: 2>, tpu.core_type = #tpu.core_type<sc_scalar_subcore>, window_params = []} {
    return
  }
}

module attributes {stable_mosaic.version = 11 : i64} {
  func.func private @main(%arg0: i32) attributes {dimension_semantics = [#tpu.dimension_semantics<core_parallel>], iteration_bounds = array<i64: 2>, tpu.core_type = #tpu.core_type<sc_scalar_subcore>, window_params = []} {
    return
  }
}

module attributes {stable_mosaic.version = 11 : i64} {
  func.func @_linear_ln_kernel(%arg0: i32, %arg1: i32, %arg2: memref<1x4x128xf32, #tpu.memory_space<vmem>>, %arg3: memref<8x4xbf16, #tpu.memory_space<vmem>>, %arg4: memref<8x1xf32, #tpu.memory_space<vmem>>, %arg5: memref<8x1xf32, #tpu.memory_space<vmem>>, %arg6: memref<8x1xf32, #tpu.memory_space<vmem>>, %arg7: memref<1x8x128xbf16, #tpu.memory_space<vmem>>) attributes {dimension_semantics = [#tpu.dimension_semantics<parallel>, #tpu.dimension_semantics<parallel>], iteration_bounds = array<i64: 2, 2>, scalar_prefetch = 0 : i64, scratch_operands = 0 : i64, tpu.core_type = #tpu.core_type<tc>, window_params = [{transform_indices = @transform_0, window_bounds = array<i64: 1, 4, 128>}, {pipeline_mode = #tpu.pipeline_mode<synchronous>, transform_indices = @transform_1, window_bounds = array<i64: 8, 4>}, {pipeline_mode = #tpu.pipeline_mode<synchronous>, transform_indices = @transform_2, window_bounds = array<i64: 8, 1>}, {pipeline_mode = #tpu.pipeline_mode<synchronous>, transform_indices = @transform_3, window_bounds = array<i64: 8, 1>}, {pipeline_mode = #tpu.pipeline_mode<synchronous>, transform_indices = @transform_4, window_bounds = array<i64: 8, 1>}, {transform_indices = @transform_5, window_bounds = array<i64: 1, 8, 128>}]} {
    %c0 = arith.constant 0 : index
    %c0_0 = arith.constant 0 : index
    %c0_1 = arith.constant 0 : index
    %0 = vector.load %arg2[%c0, %c0_0, %c0_1] : memref<1x4x128xf32, #tpu.memory_space<vmem>>, vector<1x4x128xf32>
    %1 = vector.shape_cast %0 : vector<1x4x128xf32> to vector<4x128xf32>
    %2 = arith.truncf %1 : vector<4x128xf32> to vector<4x128xbf16>
    %c0_2 = arith.constant 0 : index
    %c0_3 = arith.constant 0 : index
    %3 = vector.load %arg3[%c0_2, %c0_3] : memref<8x4xbf16, #tpu.memory_space<vmem>>, vector<8x4xbf16>
    %cst = arith.constant dense<0.000000e+00> : vector<8x128xf32>
    %4 = tpu.matmul %3, %2, %cst {dimension_numbers = #tpu.dot_dimension_numbers<[1], [0], [0], [1], [0, 0, 1, 1], [], []>} : vector<8x4xbf16>, vector<4x128xbf16>, vector<8x128xf32> -> vector<8x128xf32>
    %c0_4 = arith.constant 0 : index
    %c0_5 = arith.constant 0 : index
    %5 = vector.load %arg4[%c0_4, %c0_5] : memref<8x1xf32, #tpu.memory_space<vmem>>, vector<8x1xf32>
    %6 = vector.broadcast %5 : vector<8x1xf32> to vector<8x128xf32>
    %7 = arith.addf %4, %6 : vector<8x128xf32>
    %cst_6 = arith.constant dense<0.000000e+00> : vector<128xf32>
    %8 = vector.multi_reduction <add>, %7, %cst_6 [0] : vector<8x128xf32> to vector<128xf32>
    %9 = vector.shape_cast %8 : vector<128xf32> to vector<1x128xf32>
    %cst_7 = arith.constant 8.000000e+00 : f32
    %10 = vector.broadcast %cst_7 : f32 to vector<1x128xf32>
    %11 = arith.divf %9, %10 : vector<1x128xf32>
    %12 = vector.broadcast %11 : vector<1x128xf32> to vector<8x128xf32>
    %13 = arith.subf %7, %12 : vector<8x128xf32>
    %14 = arith.mulf %13, %13 : vector<8x128xf32>
    %cst_8 = arith.constant dense<0.000000e+00> : vector<128xf32>
    %15 = vector.multi_reduction <add>, %14, %cst_8 [0] : vector<8x128xf32> to vector<128xf32>
    %16 = vector.shape_cast %15 : vector<128xf32> to vector<1x128xf32>
    %cst_9 = arith.constant 8.000000e+00 : f32
    %17 = vector.broadcast %cst_9 : f32 to vector<1x128xf32>
    %18 = arith.divf %16, %17 : vector<1x128xf32>
    %cst_10 = arith.constant 9.99999997E-7 : f32
    %19 = vector.broadcast %cst_10 : f32 to vector<1x128xf32>
    %20 = arith.addf %18, %19 : vector<1x128xf32>
    %21 = math.rsqrt %20 : vector<1x128xf32>
    %22 = vector.broadcast %21 : vector<1x128xf32> to vector<8x128xf32>
    %23 = arith.mulf %13, %22 : vector<8x128xf32>
    %c0_11 = arith.constant 0 : index
    %c0_12 = arith.constant 0 : index
    %24 = vector.load %arg5[%c0_11, %c0_12] : memref<8x1xf32, #tpu.memory_space<vmem>>, vector<8x1xf32>
    %25 = vector.broadcast %24 : vector<8x1xf32> to vector<8x128xf32>
    %26 = arith.mulf %23, %25 : vector<8x128xf32>
    %c0_13 = arith.constant 0 : index
    %c0_14 = arith.constant 0 : index
    %27 = vector.load %arg6[%c0_13, %c0_14] : memref<8x1xf32, #tpu.memory_space<vmem>>, vector<8x1xf32>
    %28 = vector.broadcast %27 : vector<8x1xf32> to vector<8x128xf32>
    %29 = arith.addf %26, %28 : vector<8x128xf32>
    %30 = arith.truncf %29 : vector<8x128xf32> to vector<8x128xbf16>
    %c0_15 = arith.constant 0 : index
    %c0_16 = arith.constant 0 : index
    %c0_17 = arith.constant 0 : index
    %31 = vector.load %arg7[%c0_15, %c0_16, %c0_17] : memref<1x8x128xbf16, #tpu.memory_space<vmem>>, vector<1x8x128xbf16>
    %32 = vector.shape_cast %31 : vector<1x8x128xbf16> to vector<8x128xbf16>
    %33 = vector.shape_cast %30 : vector<8x128xbf16> to vector<1x8x128xbf16>
    tpu.vector_store %arg7[%c0_15, %c0_16, %c0_17], %33 {strides = array<i32>} : memref<1x8x128xbf16, #tpu.memory_space<vmem>>, vector<1x8x128xbf16>,
    return
  }
  func.func @transform_0(%arg0: i32, %arg1: i32) -> (i32, i32, i32) {
    %c0_i32 = arith.constant 0 : i32
    %c0_i32_0 = arith.constant 0 : i32
    return %arg0, %c0_i32, %arg1 : i32, i32, i32
  }
  func.func @transform_1(%arg0: i32, %arg1: i32) -> (i32, i32) {
    %c0_i32 = arith.constant 0 : i32
    %c0_i32_0 = arith.constant 0 : i32
    %c0_i32_1 = arith.constant 0 : i32
    return %c0_i32, %c0_i32_0 : i32, i32
  }
  func.func @transform_2(%arg0: i32, %arg1: i32) -> (i32, i32) {
    %c0_i32 = arith.constant 0 : i32
    %c0_i32_0 = arith.constant 0 : i32
    %c0_i32_1 = arith.constant 0 : i32
    return %c0_i32, %c0_i32_0 : i32, i32
  }
  func.func @transform_3(%arg0: i32, %arg1: i32) -> (i32, i32) {
    %c0_i32 = arith.constant 0 : i32
    %c0_i32_0 = arith.constant 0 : i32
    %c0_i32_1 = arith.constant 0 : i32
    return %c0_i32, %c0_i32_0 : i32, i32
  }
  func.func @transform_4(%arg0: i32, %arg1: i32) -> (i32, i32) {
    %c0_i32 = arith.constant 0 : i32
    %c0_i32_0 = arith.constant 0 : i32
    %c0_i32_1 = arith.constant 0 : i32
    return %c0_i32, %c0_i32_0 : i32, i32
  }
  func.func @transform_5(%arg0: i32, %arg1: i32) -> (i32, i32, i32) {
    %c0_i32 = arith.constant 0 : i32
    %c0_i32_0 = arith.constant 0 : i32
    return %arg0, %c0_i32, %arg1 : i32, i32, i32
  }
}

module attributes {stable_mosaic.version = 11 : i64} {
  func.func @_upsample_kernel(%arg0: i32, %arg1: i32, %arg2: memref<1x2x16x16xbf16, #tpu.memory_space<vmem>>, %arg3: memref<16x32xbf16, #tpu.memory_space<vmem>>, %arg4: memref<16x32xbf16, #tpu.memory_space<vmem>>, %arg5: memref<1x2x32x32xf32, #tpu.memory_space<vmem>>) attributes {dimension_semantics = [#tpu.dimension_semantics<parallel>, #tpu.dimension_semantics<parallel>], iteration_bounds = array<i64: 2, 4>, scalar_prefetch = 0 : i64, scratch_operands = 0 : i64, tpu.core_type = #tpu.core_type<tc>, window_params = [{transform_indices = @transform_0, window_bounds = array<i64: 1, 2, 16, 16>}, {pipeline_mode = #tpu.pipeline_mode<synchronous>, transform_indices = @transform_1, window_bounds = array<i64: 16, 32>}, {pipeline_mode = #tpu.pipeline_mode<synchronous>, transform_indices = @transform_2, window_bounds = array<i64: 16, 32>}, {transform_indices = @transform_3, window_bounds = array<i64: 1, 2, 32, 32>}]} {
    %c0 = arith.constant 0 : index
    %c0_0 = arith.constant 0 : index
    %c0_1 = arith.constant 0 : index
    %c0_2 = arith.constant 0 : index
    %0 = vector.load %arg2[%c0, %c0_0, %c0_1, %c0_2] : memref<1x2x16x16xbf16, #tpu.memory_space<vmem>>, vector<1x2x16x16xbf16>
    %1 = vector.shape_cast %0 : vector<1x2x16x16xbf16> to vector<2x16x16xbf16>
    %2 = arith.extf %1 : vector<2x16x16xbf16> to vector<2x16x16xf32>
    %3 = tpu.transpose %2, [0, 2, 1] : vector<2x16x16xf32> -> vector<2x16x16xf32>
    %4 = vector.shape_cast %3 : vector<2x16x16xf32> to vector<32x16xf32>
    %5 = arith.truncf %4 : vector<32x16xf32> to vector<32x16xbf16>
    %c0_3 = arith.constant 0 : index
    %c0_4 = arith.constant 0 : index
    %6 = vector.load %arg3[%c0_3, %c0_4] : memref<16x32xbf16, #tpu.memory_space<vmem>>, vector<16x32xbf16>
    %cst = arith.constant dense<0.000000e+00> : vector<32x32xf32>
    %7 = tpu.matmul %5, %6, %cst {dimension_numbers = #tpu.dot_dimension_numbers<[1], [0], [0], [1], [0, 0, 1, 1], [], []>} : vector<32x16xbf16>, vector<16x32xbf16>, vector<32x32xf32> -> vector<32x32xf32>
    %8 = vector.shape_cast %7 : vector<32x32xf32> to vector<2x16x32xf32>
    %9 = tpu.transpose %8, [0, 2, 1] : vector<2x16x32xf32> -> vector<2x32x16xf32>
    %10 = vector.shape_cast %9 : vector<2x32x16xf32> to vector<64x16xf32>
    %11 = arith.truncf %10 : vector<64x16xf32> to vector<64x16xbf16>
    %c0_5 = arith.constant 0 : index
    %c0_6 = arith.constant 0 : index
    %12 = vector.load %arg4[%c0_5, %c0_6] : memref<16x32xbf16, #tpu.memory_space<vmem>>, vector<16x32xbf16>
    %cst_7 = arith.constant dense<0.000000e+00> : vector<64x32xf32>
    %13 = tpu.matmul %11, %12, %cst_7 {dimension_numbers = #tpu.dot_dimension_numbers<[1], [0], [0], [1], [0, 0, 1, 1], [], []>} : vector<64x16xbf16>, vector<16x32xbf16>, vector<64x32xf32> -> vector<64x32xf32>
    %14 = vector.shape_cast %13 : vector<64x32xf32> to vector<2x32x32xf32>
    %c0_8 = arith.constant 0 : index
    %c0_9 = arith.constant 0 : index
    %c0_10 = arith.constant 0 : index
    %c0_11 = arith.constant 0 : index
    %15 = vector.load %arg5[%c0_8, %c0_9, %c0_10, %c0_11] : memref<1x2x32x32xf32, #tpu.memory_space<vmem>>, vector<1x2x32x32xf32>
    %16 = vector.shape_cast %15 : vector<1x2x32x32xf32> to vector<2x32x32xf32>
    %17 = vector.shape_cast %14 : vector<2x32x32xf32> to vector<1x2x32x32xf32>
    tpu.vector_store %arg5[%c0_8, %c0_9, %c0_10, %c0_11], %17 {strides = array<i32>} : memref<1x2x32x32xf32, #tpu.memory_space<vmem>>, vector<1x2x32x32xf32>,
    return
  }
  func.func @transform_0(%arg0: i32, %arg1: i32) -> (i32, i32, i32, i32) {
    %c0_i32 = arith.constant 0 : i32
    %c0_i32_0 = arith.constant 0 : i32
    %c0_i32_1 = arith.constant 0 : i32
    return %arg0, %arg1, %c0_i32, %c0_i32_0 : i32, i32, i32, i32
  }
  func.func @transform_1(%arg0: i32, %arg1: i32) -> (i32, i32) {
    %c0_i32 = arith.constant 0 : i32
    %c0_i32_0 = arith.constant 0 : i32
    %c0_i32_1 = arith.constant 0 : i32
    return %c0_i32, %c0_i32_0 : i32, i32
  }
  func.func @transform_2(%arg0: i32, %arg1: i32) -> (i32, i32) {
    %c0_i32 = arith.constant 0 : i32
    %c0_i32_0 = arith.constant 0 : i32
    %c0_i32_1 = arith.constant 0 : i32
    return %c0_i32, %c0_i32_0 : i32, i32
  }
  func.func @transform_3(%arg0: i32, %arg1: i32) -> (i32, i32, i32, i32) {
    %c0_i32 = arith.constant 0 : i32
    %c0_i32_0 = arith.constant 0 : i32
    %c0_i32_1 = arith.constant 0 : i32
    return %arg0, %arg1, %c0_i32, %c0_i32_0 : i32, i32, i32, i32
  }
}

</mosaic_0001>

<llo_original>
// kernel: _lambda_.2
$region0: #{_lambda_.2}
  #allocation0 [shape = 'u32[]', space=smem, size = 0x4, offset = 0x4, fixed_abs, tag = 'smem constant byte address 0x4 - core index']
  #allocation1 [shape = 'u32[144,128]{1,0:T(1,128)}', space=vmem, size = 0x12000, scoped, tag = 'internal scratch']
  %s0 = inlined_call_operand.vmem [shape: f32[2,4,256], index: 0, kind: input, shape index: {}]
  %s1 = inlined_call_operand.vmem [shape: bf16[8,4], index: 1, kind: input, shape index: {}]
  %s2 = inlined_call_operand.vmem [shape: f32[8,1], index: 2, kind: input, shape index: {}]
  %s3 = inlined_call_operand.vmem [shape: f32[8,1], index: 3, kind: input, shape index: {}]
  %s4 = inlined_call_operand.vmem [shape: f32[8,1], index: 4, kind: input, shape index: {}]
  %s5 = inlined_call_operand.vmem [shape: bf16[2,8,256], index: 5, kind: output, shape index: {}]
  %s6 = sld [smem:[#allocation0]]
  $region53: #{_lambda_.2} parent=0
    _
  %s8 = ssub.s32 1, %s6
  %s9 = scalar_select 0, %s8, %s6
  loop: start=0, step=1, limit=6
  $region2: #{_lambda_.2} parent=0 // loop_pre_header
    _
  $region3: #{_lambda_.2} parent=0 // loop_header
    %s11 = sphi 0, %s15
    %p12 = scmp.ge.s32.totalorder %s11, 6
    %s18 = sphi 0, %s30
    %s19 = sphi 0, %s26
    %s20 = sphi 0, %s18
    %s21 = sphi 0, %s19
    %s22 = sphi 0, %s20
    %s23 = sphi 0, %s21
    %s35 = sphi 0, %s37
    %s38 = sphi 0, %s35
    %s39 = sphi 0, %s38
    %s55 = sphi 0, %s39
    %s59 = sphi 0, %s59
    %s61 = sphi 0, %s59
    %s62 = sphi 0, %s61
    %s76 = sphi 0, %s62
    %s80 = sphi 0, %s80
    %s82 = sphi 0, %s80
    %s83 = sphi 0, %s82
    %s97 = sphi 0, %s83
    %s101 = sphi 0, %s101
    %s103 = sphi 0, %s101
    %s104 = sphi 0, %s103
    %s118 = sphi 0, %s104
    %s122 = sphi 0, %s122
    %s124 = sphi 0, %s122
    %s125 = sphi 0, %s124
    %s139 = sphi 0, %s125
    %s147 = sphi 0, %s149
    %s150 = sphi 0, %s147
    %s151 = sphi 0, %s150
    %s167 = sphi 0, %s151
  $region4: #{_lambda_.2} parent=0 // loop_header_branch
    %14 = sbr.rel (%p12) target = $region8
  $region5: #{_lambda_.2} parent=0 // loop_body
    %s16 = ssub.s32 %s11, 1
    %s17 = ssub.s32 %s11, 2
    %s24 = sadd.s32 1, %s19
    %p25 = scmp.ge.s32.totalorder %s24, 2
    %s26 = scalar_select %p25, 0, %s24
    %s27 = sadd.s32 1, %s18
    %s28 = scalar_select %p25, %s27, %s18
    %p29 = scmp.ge.s32.totalorder %s28, 2
    %s30 = scalar_select %p29, 0, %s28
    %s31 = ssub.s32 %s18, %s30
    %s32 = ssub.s32 %s19, %s26
    %s33 = sor.u32 %s31, %s32
    %p34 = scmp.eq.s32.totalorder %s33, 0
    %s36 = sadd.s32 %s35, 1
    %s37 = scalar_select %p34, %s35, %s36
    %p40 = pneg %p34
    %p41 = scmp.eq.s32.totalorder %s11, 3
    %p42 = por %p40, %p41
    %p43 = scmp.ne.s32.totalorder %s35, %s38
    %p44 = scmp.eq.s32.totalorder %s11, 0
    %p45 = por %p43, %p44
    %p46 = scmp.ne.s32.totalorder %s35, %s38
    %p47 = scmp.eq.s32.totalorder %s16, 3
    %p48 = por %p46, %p47
    %p49 = scmp.ne.s32.totalorder %s38, %s39
    %p50 = scmp.eq.s32.totalorder %s16, 0
    %p51 = por %p49, %p50
    %p52 = scmp.ne.s32.totalorder %s38, %s39
    %p53 = scmp.eq.s32.totalorder %s17, 3
    %p54 = por %p52, %p53
    %p56 = scmp.ne.s32.totalorder %s39, %s55
    %p57 = scmp.eq.s32.totalorder %s17, 0
    %p58 = por %p56, %p57
    %s60 = sadd.s32 %s59, 1
    %p63 = scmp.eq.s32.totalorder %s11, 3
    %p64 = scmp.ne.s32.totalorder %s59, %s61
    %p65 = scmp.eq.s32.totalorder %s11, 0
    %p66 = por %p64, %p65
    %p67 = scmp.ne.s32.totalorder %s59, %s61
    %p68 = scmp.eq.s32.totalorder %s16, 3
    %p69 = por %p67, %p68
    %p70 = scmp.ne.s32.totalorder %s61, %s62
    %p71 = scmp.eq.s32.totalorder %s16, 0
    %p72 = por %p70, %p71
    %p73 = scmp.ne.s32.totalorder %s61, %s62
    %p74 = scmp.eq.s32.totalorder %s17, 3
    %p75 = por %p73, %p74
    %p77 = scmp.ne.s32.totalorder %s62, %s76
    %p78 = scmp.eq.s32.totalorder %s17, 0
    %p79 = por %p77, %p78
    %s81 = sadd.s32 %s80, 1
    %p84 = scmp.eq.s32.totalorder %s11, 3
    %p85 = scmp.ne.s32.totalorder %s80, %s82
    %p86 = scmp.eq.s32.totalorder %s11, 0
    %p87 = por %p85, %p86
    %p88 = scmp.ne.s32.totalorder %s80, %s82
    %p89 = scmp.eq.s32.totalorder %s16, 3
    %p90 = por %p88, %p89
    %p91 = scmp.ne.s32.totalorder %s82, %s83
    %p92 = scmp.eq.s32.totalorder %s16, 0
    %p93 = por %p91, %p92
    %p94 = scmp.ne.s32.totalorder %s82, %s83
    %p95 = scmp.eq.s32.totalorder %s17, 3
    %p96 = por %p94, %p95
    %p98 = scmp.ne.s32.totalorder %s83, %s97
    %p99 = scmp.eq.s32.totalorder %s17, 0
    %p100 = por %p98, %p99
    %s102 = sadd.s32 %s101, 1
    %p105 = scmp.eq.s32.totalorder %s11, 3
    %p106 = scmp.ne.s32.totalorder %s101, %s103
    %p107 = scmp.eq.s32.totalorder %s11, 0
    %p108 = por %p106, %p107
    %p109 = scmp.ne.s32.totalorder %s101, %s103
    %p110 = scmp.eq.s32.totalorder %s16, 3
    %p111 = por %p109, %p110
    %p112 = scmp.ne.s32.totalorder %s103, %s104
    %p113 = scmp.eq.s32.totalorder %s16, 0
    %p114 = por %p112, %p113
    %p115 = scmp.ne.s32.totalorder %s103, %s104
    %p116 = scmp.eq.s32.totalorder %s17, 3
    %p117 = por %p115, %p116
    %p119 = scmp.ne.s32.totalorder %s104, %s118
    %p120 = scmp.eq.s32.totalorder %s17, 0
    %p121 = por %p119, %p120
    %s123 = sadd.s32 %s122, 1
    %p126 = scmp.eq.s32.totalorder %s11, 3
    %p127 = scmp.ne.s32.totalorder %s122, %s124
    %p128 = scmp.eq.s32.totalorder %s11, 0
    %p129 = por %p127, %p128
    %p130 = scmp.ne.s32.totalorder %s122, %s124
    %p131 = scmp.eq.s32.totalorder %s16, 3
    %p132 = por %p130, %p131
    %p133 = scmp.ne.s32.totalorder %s124, %s125
    %p134 = scmp.eq.s32.totalorder %s16, 0
    %p135 = por %p133, %p134
    %p136 = scmp.ne.s32.totalorder %s124, %s125
    %p137 = scmp.eq.s32.totalorder %s17, 3
    %p138 = por %p136, %p137
    %p140 = scmp.ne.s32.totalorder %s125, %s139
    %p141 = scmp.eq.s32.totalorder %s17, 0
    %p142 = por %p140, %p141
    %s143 = ssub.s32 %s18, %s30
    %s144 = ssub.s32 %s19, %s26
    %s145 = sor.u32 %s143, %s144
    %p146 = scmp.eq.s32.totalorder %s145, 0
    %s148 = sadd.s32 %s147, 1
    %s149 = scalar_select %p146, %s147, %s148
    %p152 = pneg %p146
    %p153 = scmp.eq.s32.totalorder %s11, 3
    %p154 = por %p152, %p153
    %p155 = scmp.ne.s32.totalorder %s147, %s150
    %p156 = scmp.eq.s32.totalorder %s11, 0
    %p157 = por %p155, %p156
    %p158 = scmp.ne.s32.totalorder %s147, %s150
    %p159 = scmp.eq.s32.totalorder %s16, 3
    %p160 = por %p158, %p159
    %p161 = scmp.ne.s32.totalorder %s150, %s151
    %p162 = scmp.eq.s32.totalorder %s16, 0
    %p163 = por %p161, %p162
    %p164 = scmp.ne.s32.totalorder %s150, %s151
    %p165 = scmp.eq.s32.totalorder %s17, 3
    %p166 = por %p164, %p165
    %p168 = scmp.ne.s32.totalorder %s151, %s167
    %p169 = scmp.eq.s32.totalorder %s17, 0
    %p170 = por %p168, %p169
    %p171 = scmp.le.s32.totalorder 1, %s11
    %p172 = scmp.lt.s32.totalorder %s11, 5
    %p173 = pnand %p171, %p172
    %p174 = pneg %p173
    // Predicated region
    $region9: #{_lambda_.2} parent=5 // pred_check
      _
    $region10: #{_lambda_.2} parent=5 // pred_check_branch
      %176 = sbr.rel (%p173) target = $region12
    $region11: #{_lambda_.2} parent=5 // pred_region
      %s177 = ssub.s32 %s11, 1
      // Predicated region
      $region13: #{_lambda_.2} parent=11 // pred_check
        %p178 = pneg %p72
      $region14: #{_lambda_.2} parent=11 // pred_check_branch
        %180 = sbr.rel (%p178) target = $region16
      $region15: #{_lambda_.2} parent=11 // pred_region
        _
      $region16: #{_lambda_.2} parent=11 // pred_fallthru
        _
      // Predicated region
      $region17: #{_lambda_.2} parent=11 // pred_check
        %p181 = pneg %p93
      $region18: #{_lambda_.2} parent=11 // pred_check_branch
        %183 = sbr.rel (%p181) target = $region20
      $region19: #{_lambda_.2} parent=11 // pred_region
        _
      $region20: #{_lambda_.2} parent=11 // pred_fallthru
        _
      // Predicated region
      $region21: #{_lambda_.2} parent=11 // pred_check
        %p184 = pneg %p114
      $region22: #{_lambda_.2} parent=11 // pred_check_branch
        %186 = sbr.rel (%p184) target = $region24
      $region23: #{_lambda_.2} parent=11 // pred_region
        _
      $region24: #{_lambda_.2} parent=11 // pred_fallthru
        _
      // Predicated region
      $region25: #{_lambda_.2} parent=11 // pred_check
        %p187 = pneg %p135
      $region26: #{_lambda_.2} parent=11 // pred_check_branch
        %189 = sbr.rel (%p187) target = $region28
      $region27: #{_lambda_.2} parent=11 // pred_region
        _
      $region28: #{_lambda_.2} parent=11 // pred_fallthru
        _
    $region12: #{_lambda_.2} parent=5 // pred_fallthru
      _
    %p190 = scmp.lt.s32.totalorder %s11, 4
    // Predicated region
    $region29: #{_lambda_.2} parent=5 // pred_check
      %p191 = pneg %p190
    $region30: #{_lambda_.2} parent=5 // pred_check_branch
      %193 = sbr.rel (%p191) target = $region32
    $region31: #{_lambda_.2} parent=5 // pred_region
      // Predicated region
      $region33: #{_lambda_.2} parent=31 // pred_check
        %p194 = pneg %p45
      $region34: #{_lambda_.2} parent=31 // pred_check_branch
        %196 = sbr.rel (%p194) target = $region36
      $region35: #{_lambda_.2} parent=31 // pred_region
        %p197 = scmp.lt.s32.totalorder %s18, 1
        %s198 = scalar_select %p197, %s18, 1
        %p199 = scmp.lt.s32.totalorder %s19, 1
        %s200 = scalar_select %p199, %s19, 1
        %s201 = smul.addr %s198, 2
        %s202 = sadd.s32 %s200, %s201
        %s203 = smul.addr %s202, 4
        %s204 = scalar_lea.vmem %s0, %s203
      $region36: #{_lambda_.2} parent=31 // pred_fallthru
        _
    $region32: #{_lambda_.2} parent=5 // pred_fallthru
      _
    %p205 = scmp.le.s32.totalorder 1, %s11
    %p206 = scmp.lt.s32.totalorder %s11, 5
    %p207 = pnand %p205, %p206
    %p208 = pneg %p207
    // Predicated region
    $region37: #{_lambda_.2} parent=5 // pred_check
      _
    $region38: #{_lambda_.2} parent=5 // pred_check_branch
      %210 = sbr.rel (%p207) target = $region40
    $region39: #{_lambda_.2} parent=5 // pred_region
      %s211 = ssub.s32 %s11, 1
      %p212 = scmp.lt.s32.totalorder %s20, 1
      %s213 = scalar_select %p212, %s20, 1
      %p214 = scmp.lt.s32.totalorder %s21, 1
      %s215 = scalar_select %p214, %s21, 1
      %s216 = smul.addr %s213, 2
      %s217 = sadd.s32 %s215, %s216
      %s218 = smul.addr %s217, 4
      %s219 = scalar_lea.vmem %s0, %s218
      %p220 = pneg %p51
      %p221 = pneg %p48
      %p222 = pneg %p72
      %p223 = pneg %p69
      %p224 = pneg %p93
      %p225 = pneg %p90
      %p226 = pneg %p114
      %p227 = pneg %p111
      %p228 = pneg %p135
      %p229 = pneg %p132
      %p230 = pneg %p163
      %p231 = pneg %p160
      %p232 = scmp.lt.s32.totalorder %s20, 1
      %s233 = scalar_select %p232, %s20, 1
      %p234 = scmp.lt.s32.totalorder %s21, 1
      %s235 = scalar_select %p234, %s21, 1
      %s236 = smul.addr %s233, 2
      %s237 = sadd.s32 %s235, %s236
      %s238 = smul.addr %s237, 4
      %s239 = scalar_lea.vmem %s5, %s238
      %p240 = scmp.lt.s32.totalorder %s20, 1
      %s241 = scalar_select %p240, %s20, 1
      %p242 = scmp.lt.s32.totalorder %s21, 1
      %s243 = scalar_select %p242, %s21, 1
      %s244 = smul.addr %s241, 2
      %s245 = sadd.s32 %s243, %s244
      %s246 = smul.addr %s245, 4
      %s247 = scalar_lea.vmem %s0, %s246
      %p248 = scmp.lt.s32.totalorder %s20, 1
      %s249 = scalar_select %p248, %s20, 1
      %p250 = scmp.lt.s32.totalorder %s21, 1
      %s251 = scalar_select %p250, %s21, 1
      %s252 = smul.addr %s249, 2
      %s253 = sadd.s32 %s251, %s252
      %s254 = smul.addr %s253, 4
      %s255 = scalar_lea.vmem %s5, %s254
      %v257 = vld [vmem:[%s247] sm:$0xf]
      %v258 = vpack.c.bf16 %v257, %v257
      %v259 = vld [vmem:[%s1] sm:$0xf]
      %v260 = vld [vmem:[%s2] sm:$0xff]
      %262 = vset.pattern.permute.xlu0 0
      %263 = vperm.xlu0 %262, %v260
      %v264 = vpop.permute.xlu0 %263
      %vm266 = vcmask 31744
      %v268 = vsel %vm266, %v259, 0
      %vm270 = vcmask 1041408
      %v272 = vsel %vm270, %v258, 0
      %274 = vmatprep.subr.bf16.mxu0 0
      %275 = vmatpush1.bf16.msra.mxu0 %v272
      %276 = vmatprep.subr.bf16.mxu0 0
      %277 = vmatpush1.bf16.msra.mxu0 0
      %278 = vmatprep.subr.bf16.mxu0 0
      %279 = vmatpush1.bf16.msra.mxu0 0
      %280 = vmatprep.subr.bf16.mxu0 0
      %281 = vmatpush1.bf16.msra.mxu0 0
      %282 = vmatprep.subr.bf16.mxu0 0
      %283 = vmatpush1.bf16.msra.mxu0 0
      %284 = vmatprep.subr.bf16.mxu0 0
      %285 = vmatpush1.bf16.msra.mxu0 0
      %286 = vmatprep.subr.bf16.mxu0 0
      %287 = vmatpush1.bf16.msra.mxu0 0
      %288 = vmatprep.subr.bf16.mxu0 0
      %289 = vmatpush1.bf16.msra.mxu0 0
      %290 = vmatprep.subr.bf16.mxu0 0
      %291 = vmatpush1.bf16.msra.mxu0 0
      %292 = vmatprep.subr.bf16.mxu0 0
      %293 = vmatpush1.bf16.msra.mxu0 0
      %294 = vmatprep.subr.bf16.mxu0 0
      %295 = vmatpush1.bf16.msra.mxu0 0
      %296 = vmatprep.subr.bf16.mxu0 0
      %297 = vmatpush1.bf16.msra.mxu0 0
      %298 = vmatprep.subr.bf16.mxu0 0
      %299 = vmatpush1.bf16.msra.mxu0 0
      %300 = vmatprep.subr.bf16.mxu0 0
      %301 = vmatpush1.bf16.msra.mxu0 0
      %302 = vmatprep.subr.bf16.mxu0 0
      %303 = vmatpush1.bf16.msra.mxu0 0
      %304 = vmatprep.subr.bf16.mxu0 0
      %305 = vmatpush1.bf16.msra.mxu0 0
      %306 = vmatprep.mubr.bf16.mxu0 0
      %307 = vmatmul.mubr.bf16.gmra.mrb[0].mxu0 %v268
      %v308 = vpop.f32.mrb[0].mxu0
      %v309 = vadd.f32 %v264, %v308
      %v310 = vpop.f32.mrb[0].mxu0
      %v311 = vpop.f32.mrb[0].mxu0
      %v312 = vpop.f32.mrb[0].mxu0
      %313 = vdwg.mxu0
      %v314 = vrot.slane %v309, 4
      %v315 = vadd.f32 %v309, %v314
      %v316 = vrot.slane %v315, 2
      %v317 = vadd.f32 %v315, %v316
      %v318 = vrot.slane %v317, 1
      %v319 = vadd.f32 %v317, %v318
      %v320 = vrcp.pop 8.0
      %v321 = vmul.f32 %v319, %v320
      %v322 = vsub.f32 %v309, %v321
      %v323 = vmul.f32 %v322, %v322
      %v324 = vrot.slane %v323, 4
      %v325 = vadd.f32 %v323, %v324
      %v326 = vrot.slane %v325, 2
      %v327 = vadd.f32 %v325, %v326
      %v328 = vrot.slane %v327, 1
      %v329 = vadd.f32 %v327, %v328
      %v330 = vmul.f32 %v329, %v320
      %v331 = vadd.f32 %v330, 1e-06
      %v332 = vrsqrt.pop %v331
      %v333 = vmul.f32 %v322, %v332
      %v334 = vld [vmem:[%s3] sm:$0xff]
      %336 = vset.pattern.permute.xlu0 0
      %337 = vperm.xlu0 %336, %v334
      %v338 = vpop.permute.xlu0 %337
      %v340 = vmul.f32 %v333, %v338
      %v341 = vld [vmem:[%s4] sm:$0xff]
      %343 = vset.pattern.permute.xlu0 0
      %344 = vperm.xlu0 %343, %v341
      %v345 = vpop.permute.xlu0 %344
      %v347 = vadd.f32 %v340, %v345
      %v348 = vpack.c.bf16 %v347, %v347
      %349 = vst [vmem:[%s255] sm:$0xf] %v348
      %p350 = scmp.lt.s32.totalorder %s20, 1
      %s351 = scalar_select %p350, %s20, 1
      %p352 = scmp.lt.s32.totalorder %s21, 1
      %s353 = scalar_select %p352, %s21, 1
      %s354 = smul.addr %s351, 2
      %s355 = sadd.s32 %s353, %s354
      %s356 = smul.addr %s355, 4
      %s357 = scalar_lea.vmem %s5, %s356
      // Predicated region
      $region41: #{_lambda_.2} parent=39 // pred_check
        %p358 = pneg %p160
      $region42: #{_lambda_.2} parent=39 // pred_check_branch
        %360 = sbr.rel (%p358) target = $region44
      $region43: #{_lambda_.2} parent=39 // pred_region
        _
      $region44: #{_lambda_.2} parent=39 // pred_fallthru
        _
    $region40: #{_lambda_.2} parent=5 // pred_fallthru
      _
    %p361 = scmp.le.s32.totalorder 2, %s11
    // Predicated region
    $region45: #{_lambda_.2} parent=5 // pred_check
      %p362 = pneg %p361
    $region46: #{_lambda_.2} parent=5 // pred_check_branch
      %364 = sbr.rel (%p362) target = $region48
    $region47: #{_lambda_.2} parent=5 // pred_region
      %s365 = ssub.s32 %s11, 2
      // Predicated region
      $region49: #{_lambda_.2} parent=47 // pred_check
        %p366 = pneg %p166
      $region50: #{_lambda_.2} parent=47 // pred_check_branch
        %368 = sbr.rel (%p366) target = $region52
      $region51: #{_lambda_.2} parent=47 // pred_region
        %p369 = scmp.lt.s32.totalorder %s22, 1
        %s370 = scalar_select %p369, %s22, 1
        %p371 = scmp.lt.s32.totalorder %s23, 1
        %s372 = scalar_select %p371, %s23, 1
        %s373 = smul.addr %s370, 2
        %s374 = sadd.s32 %s372, %s373
        %s375 = smul.addr %s374, 4
        %s376 = scalar_lea.vmem %s5, %s375
      $region52: #{_lambda_.2} parent=47 // pred_fallthru
        _
    $region48: #{_lambda_.2} parent=5 // pred_fallthru
      _
  $region6: #{_lambda_.2} parent=0 // loop_footer
    %s15 = sadd.s32 1, %s11
  $region7: #{_lambda_.2} parent=0 // loop_footer_branch
    %10 = sbr.rel target = $region3
  $region8: #{_lambda_.2} parent=0 // loop_exit
    _

// kernel: _lambda_.3
$region0: #{_lambda_.3}
  #allocation0 [shape = 'u32[]', space=smem, size = 0x4, offset = 0x4, fixed_abs, tag = 'smem constant byte address 0x4 - core index']
  #allocation1 [shape = 'u32[144,128]{1,0:T(1,128)}', space=vmem, size = 0x12000, scoped, tag = 'internal scratch']
  %s0 = inlined_call_operand.vmem [shape: bf16[2,8,16,16], index: 0, kind: input, shape index: {}]
  %s1 = inlined_call_operand.vmem [shape: bf16[16,32], index: 1, kind: input, shape index: {}, may-alias: {1,2}]
  %s2 = inlined_call_operand.vmem [shape: bf16[16,32], index: 2, kind: input, shape index: {}, may-alias: {1,2}]
  %s3 = inlined_call_operand.hbm [shape: f32[2,8,32,32], index: 3, kind: output, shape index: {}]
  %s4 = sld [smem:[#allocation0]]
  $region45: #{_lambda_.3} parent=0
    _
  %s6 = ssub.s32 1, %s4
  %s7 = scalar_select 0, %s6, %s4
  $region1: #{_lambda_.3} parent=0
    #allocation2 [shape = 'u8[65536]{0}', space=vmem, size = 0x10000, scoped, tag = 'output window, operand 0']
    #allocation3 [shape = 's32[2]{0}', space=sflag, size = 0x8, scoped, tag = 'scoped memory for _lambda_.3']
    %8 = vsyncpa [#allocation3], 0
    %s9 = scalar_lea.sflag [#allocation3], 1
    %10 = vsyncpa %s9, 0
    loop: start=0, step=1, limit=10
    $region2: #{_lambda_.3} parent=1 // loop_pre_header
      _
    $region3: #{_lambda_.3} parent=1 // loop_header
      %s12 = sphi 0, %s16
      %p13 = scmp.ge.s32.totalorder %s12, 10
      %s19 = sphi 0, %s31
      %s20 = sphi 0, %s27
      %s21 = sphi 0, %s19
      %s22 = sphi 0, %s20
      %s23 = sphi 0, %s21
      %s24 = sphi 0, %s22
      %s36 = sphi 0, %s38
      %s39 = sphi 0, %s36
      %s40 = sphi 0, %s39
      %s56 = sphi 0, %s40
      %s60 = sphi 0, %s60
      %s62 = sphi 0, %s60
      %s63 = sphi 0, %s62
      %s77 = sphi 0, %s63
      %s81 = sphi 0, %s81
      %s83 = sphi 0, %s81
      %s84 = sphi 0, %s83
      %s98 = sphi 0, %s84
      %s106 = sphi 0, %s108
      %s109 = sphi 0, %s106
      %s110 = sphi 0, %s109
      %s126 = sphi 0, %s110
    $region4: #{_lambda_.3} parent=1 // loop_header_branch
      %15 = sbr.rel (%p13) target = $region8
    $region5: #{_lambda_.3} parent=1 // loop_body
      %s17 = ssub.s32 %s12, 1
      %s18 = ssub.s32 %s12, 2
      %s25 = sadd.s32 1, %s20
      %p26 = scmp.ge.s32.totalorder %s25, 4
      %s27 = scalar_select %p26, 0, %s25
      %s28 = sadd.s32 1, %s19
      %s29 = scalar_select %p26, %s28, %s19
      %p30 = scmp.ge.s32.totalorder %s29, 2
      %s31 = scalar_select %p30, 0, %s29
      %s32 = ssub.s32 %s19, %s31
      %s33 = ssub.s32 %s20, %s27
      %s34 = sor.u32 %s32, %s33
      %p35 = scmp.eq.s32.totalorder %s34, 0
      %s37 = sadd.s32 %s36, 1
      %s38 = scalar_select %p35, %s36, %s37
      %p41 = pneg %p35
      %p42 = scmp.eq.s32.totalorder %s12, 7
      %p43 = por %p41, %p42
      %p44 = scmp.ne.s32.totalorder %s36, %s39
      %p45 = scmp.eq.s32.totalorder %s12, 0
      %p46 = por %p44, %p45
      %p47 = scmp.ne.s32.totalorder %s36, %s39
      %p48 = scmp.eq.s32.totalorder %s17, 7
      %p49 = por %p47, %p48
      %p50 = scmp.ne.s32.totalorder %s39, %s40
      %p51 = scmp.eq.s32.totalorder %s17, 0
      %p52 = por %p50, %p51
      %p53 = scmp.ne.s32.totalorder %s39, %s40
      %p54 = scmp.eq.s32.totalorder %s18, 7
      %p55 = por %p53, %p54
      %p57 = scmp.ne.s32.totalorder %s40, %s56
      %p58 = scmp.eq.s32.totalorder %s18, 0
      %p59 = por %p57, %p58
      %s61 = sadd.s32 %s60, 1
      %p64 = scmp.eq.s32.totalorder %s12, 7
      %p65 = scmp.ne.s32.totalorder %s60, %s62
      %p66 = scmp.eq.s32.totalorder %s12, 0
      %p67 = por %p65, %p66
      %p68 = scmp.ne.s32.totalorder %s60, %s62
      %p69 = scmp.eq.s32.totalorder %s17, 7
      %p70 = por %p68, %p69
      %p71 = scmp.ne.s32.totalorder %s62, %s63
      %p72 = scmp.eq.s32.totalorder %s17, 0
      %p73 = por %p71, %p72
      %p74 = scmp.ne.s32.totalorder %s62, %s63
      %p75 = scmp.eq.s32.totalorder %s18, 7
      %p76 = por %p74, %p75
      %p78 = scmp.ne.s32.totalorder %s63, %s77
      %p79 = scmp.eq.s32.totalorder %s18, 0
      %p80 = por %p78, %p79
      %s82 = sadd.s32 %s81, 1
      %p85 = scmp.eq.s32.totalorder %s12, 7
      %p86 = scmp.ne.s32.totalorder %s81, %s83
      %p87 = scmp.eq.s32.totalorder %s12, 0
      %p88 = por %p86, %p87
      %p89 = scmp.ne.s32.totalorder %s81, %s83
      %p90 = scmp.eq.s32.totalorder %s17, 7
      %p91 = por %p89, %p90
      %p92 = scmp.ne.s32.totalorder %s83, %s84
      %p93 = scmp.eq.s32.totalorder %s17, 0
      %p94 = por %p92, %p93
      %p95 = scmp.ne.s32.totalorder %s83, %s84
      %p96 = scmp.eq.s32.totalorder %s18, 7
      %p97 = por %p95, %p96
      %p99 = scmp.ne.s32.totalorder %s84, %s98
      %p100 = scmp.eq.s32.totalorder %s18, 0
      %p101 = por %p99, %p100
      %s102 = ssub.s32 %s19, %s31
      %s103 = ssub.s32 %s20, %s27
      %s104 = sor.u32 %s102, %s103
      %p105 = scmp.eq.s32.totalorder %s104, 0
      %s107 = sadd.s32 %s106, 1
      %s108 = scalar_select %p105, %s106, %s107
      %p111 = pneg %p105
      %p112 = scmp.eq.s32.totalorder %s12, 7
      %p113 = por %p111, %p112
      %p114 = scmp.ne.s32.totalorder %s106, %s109
      %p115 = scmp.eq.s32.totalorder %s12, 0
      %p116 = por %p114, %p115
      %p117 = scmp.ne.s32.totalorder %s106, %s109
      %p118 = scmp.eq.s32.totalorder %s17, 7
      %p119 = por %p117, %p118
      %p120 = scmp.ne.s32.totalorder %s109, %s110
      %p121 = scmp.eq.s32.totalorder %s17, 0
      %p122 = por %p120, %p121
      %p123 = scmp.ne.s32.totalorder %s109, %s110
      %p124 = scmp.eq.s32.totalorder %s18, 7
      %p125 = por %p123, %p124
      %p127 = scmp.ne.s32.totalorder %s110, %s126
      %p128 = scmp.eq.s32.totalorder %s18, 0
      %p129 = por %p127, %p128
      %p130 = scmp.le.s32.totalorder 1, %s12
      %p131 = scmp.lt.s32.totalorder %s12, 9
      %p132 = pnand %p130, %p131
      %p133 = pneg %p132
      // Predicated region
      $region9: #{_lambda_.3} parent=5 // pred_check
        _
      $region10: #{_lambda_.3} parent=5 // pred_check_branch
        %135 = sbr.rel (%p132) target = $region12
      $region11: #{_lambda_.3} parent=5 // pred_region
        %s136 = ssub.s32 %s12, 1
        // Predicated region
        $region13: #{_lambda_.3} parent=11 // pred_check
          %p137 = pneg %p73
        $region14: #{_lambda_.3} parent=11 // pred_check_branch
          %139 = sbr.rel (%p137) target = $region16
        $region15: #{_lambda_.3} parent=11 // pred_region
          _
        $region16: #{_lambda_.3} parent=11 // pred_fallthru
          _
        // Predicated region
        $region17: #{_lambda_.3} parent=11 // pred_check
          %p140 = pneg %p94
        $region18: #{_lambda_.3} parent=11 // pred_check_branch
          %142 = sbr.rel (%p140) target = $region20
        $region19: #{_lambda_.3} parent=11 // pred_region
          _
        $region20: #{_lambda_.3} parent=11 // pred_fallthru
          _
      $region12: #{_lambda_.3} parent=5 // pred_fallthru
        _
      %p143 = scmp.lt.s32.totalorder %s12, 8
      // Predicated region
      $region21: #{_lambda_.3} parent=5 // pred_check
        %p144 = pneg %p143
      $region22: #{_lambda_.3} parent=5 // pred_check_branch
        %146 = sbr.rel (%p144) target = $region24
      $region23: #{_lambda_.3} parent=5 // pred_region
        // Predicated region
        $region25: #{_lambda_.3} parent=23 // pred_check
          %p147 = pneg %p46
        $region26: #{_lambda_.3} parent=23 // pred_check_branch
          %149 = sbr.rel (%p147) target = $region28
        $region27: #{_lambda_.3} parent=23 // pred_region
          %s150 = smul.u32 2, %s20
          %p151 = scmp.lt.s32.totalorder %s19, 1
          %s152 = scalar_select %p151, %s19, 1
          %p153 = scmp.lt.s32.totalorder %s150, 7
          %s154 = scalar_select %p153, %s150, 7
          %s155 = smul.addr %s154, 2
          %s156 = smul.addr %s152, 16
          %s157 = sadd.s32 %s155, %s156
          %s158 = smul.addr %s157, 4
          %s159 = scalar_lea.vmem %s0, %s158
          %s160 = smul.u32 2, %s20
        $region28: #{_lambda_.3} parent=23 // pred_fallthru
          _
      $region24: #{_lambda_.3} parent=5 // pred_fallthru
        _
      %p161 = scmp.le.s32.totalorder 1, %s12
      %p162 = scmp.lt.s32.totalorder %s12, 9
      %p163 = pnand %p161, %p162
      %p164 = pneg %p163
      // Predicated region
      $region29: #{_lambda_.3} parent=5 // pred_check
        _
      $region30: #{_lambda_.3} parent=5 // pred_check_branch
        %166 = sbr.rel (%p163) target = $region32
      $region31: #{_lambda_.3} parent=5 // pred_region
        %s167 = ssub.s32 %s12, 1
        %s168 = smul.u32 2, %s22
        %p169 = scmp.lt.s32.totalorder %s21, 1
        %s170 = scalar_select %p169, %s21, 1
        %p171 = scmp.lt.s32.totalorder %s168, 7
        %s172 = scalar_select %p171, %s168, 7
        %s173 = smul.addr %s172, 2
        %s174 = smul.addr %s170, 16
        %s175 = sadd.s32 %s173, %s174
        %s176 = smul.addr %s175, 4
        %s177 = scalar_lea.vmem %s0, %s176
        %p178 = pneg %p52
        %p179 = pneg %p49
        %p180 = pneg %p73
        %p181 = pneg %p70
        %p182 = pneg %p94
        %p183 = pneg %p91
        %p184 = pneg %p122
        %p185 = pneg %p119
        %s186 = sand.u32 %s109, 1
        %s187 = scalar_lea.sflag [#allocation3], %s186
        %s188 = sand.u32 %s109, 1
        %s189 = smul.addr %s188, 64
        %s190 = scalar_lea.vmem [#allocation2], %s189
        %s191 = smul.u32 2, %s22
        %p192 = scmp.lt.s32.totalorder %s21, 1
        %s193 = scalar_select %p192, %s21, 1
        %p194 = scmp.lt.s32.totalorder %s191, 7
        %s195 = scalar_select %p194, %s191, 7
        %s196 = smul.addr %s195, 2
        %s197 = smul.addr %s193, 16
        %s198 = sadd.s32 %s196, %s197
        %s199 = smul.addr %s198, 4
        %s200 = scalar_lea.vmem %s0, %s199
        %s201 = smul.u32 2, %s22
        %s202 = smul.u32 2, %s22
        %v204 = vld [vmem:[%s200] sm:$0xf]
        %v205 = vld [vmem:[%s200 + $0x4] sm:$0xf]
        %v206 = vld [vmem:[%s200 + $0x8] sm:$0xf]
        %v207 = vld [vmem:[%s200 + $0xc] sm:$0xf]
        %v208 = vunpack.c.l.bf16 %v204
        %v209 = vunpack.c.l.bf16 %v205
        %v210 = vunpack.c.l.bf16 %v206
        %v211 = vunpack.c.l.bf16 %v207
        %212 = vxpose.xlu0.b32.start [1/16] %v208, 128
        %213 = vxpose.xlu0.b32.cont [2/16] %v209, 128
        %214 = vxpose.xlu0.b32.cont [3/16] 0.0, 128
        %215 = vxpose.xlu0.b32.cont [4/16] 0.0, 128
        %216 = vxpose.xlu0.b32.cont [5/16] 0.0, 128
        %217 = vxpose.xlu0.b32.cont [6/16] 0.0, 128
        %218 = vxpose.xlu0.b32.cont [7/16] 0.0, 128
        %219 = vxpose.xlu0.b32.cont [8/16] 0.0, 128
        %220 = vxpose.xlu0.b32.cont [9/16] 0.0, 128
        %221 = vxpose.xlu0.b32.cont [10/16] 0.0, 128
        %222 = vxpose.xlu0.b32.cont [11/16] 0.0, 128
        %223 = vxpose.xlu0.b32.cont [12/16] 0.0, 128
        %224 = vxpose.xlu0.b32.cont [13/16] 0.0, 128
        %225 = vxpose.xlu0.b32.cont [14/16] 0.0, 128
        %226 = vxpose.xlu0.b32.cont [15/16] 0.0, 128
        %227 = vxpose.xlu0.b32.end [16/16] 0.0, 128
        %v228 = vpop.trf.xlu0
        %v229 = vpop.trf.xlu0
        %v230 = vpop.trf.xlu0
        %v231 = vpop.trf.xlu0
        %v232 = vpop.trf.xlu0
        %v233 = vpop.trf.xlu0
        %v234 = vpop.trf.xlu0
        %v235 = vpop.trf.xlu0
        %v236 = vpop.trf.xlu0
        %v237 = vpop.trf.xlu0
        %v238 = vpop.trf.xlu0
        %v239 = vpop.trf.xlu0
        %v240 = vpop.trf.xlu0
        %v241 = vpop.trf.xlu0
        %v242 = vpop.trf.xlu0
        %v243 = vpop.trf.xlu0
        %244 = vxpose.xlu0.b32.start [1/16] %v210, 128
        %245 = vxpose.xlu0.b32.cont [2/16] %v211, 128
        %246 = vxpose.xlu0.b32.cont [3/16] 0.0, 128
        %247 = vxpose.xlu0.b32.cont [4/16] 0.0, 128
        %248 = vxpose.xlu0.b32.cont [5/16] 0.0, 128
        %249 = vxpose.xlu0.b32.cont [6/16] 0.0, 128
        %250 = vxpose.xlu0.b32.cont [7/16] 0.0, 128
        %251 = vxpose.xlu0.b32.cont [8/16] 0.0, 128
        %252 = vxpose.xlu0.b32.cont [9/16] 0.0, 128
        %253 = vxpose.xlu0.b32.cont [10/16] 0.0, 128
        %254 = vxpose.xlu0.b32.cont [11/16] 0.0, 128
        %255 = vxpose.xlu0.b32.cont [12/16] 0.0, 128
        %256 = vxpose.xlu0.b32.cont [13/16] 0.0, 128
        %257 = vxpose.xlu0.b32.cont [14/16] 0.0, 128
        %258 = vxpose.xlu0.b32.cont [15/16] 0.0, 128
        %259 = vxpose.xlu0.b32.end [16/16] 0.0, 128
        %v260 = vpop.trf.xlu0
        %v261 = vpop.trf.xlu0
        %v262 = vpop.trf.xlu0
        %v263 = vpop.trf.xlu0
        %v264 = vpop.trf.xlu0
        %v265 = vpop.trf.xlu0
        %v266 = vpop.trf.xlu0
        %v267 = vpop.trf.xlu0
        %v268 = vpop.trf.xlu0
        %v269 = vpop.trf.xlu0
        %v270 = vpop.trf.xlu0
        %v271 = vpop.trf.xlu0
        %v272 = vpop.trf.xlu0
        %v273 = vpop.trf.xlu0
        %v274 = vpop.trf.xlu0
        %v275 = vpop.trf.xlu0
        %v276 = vpack.c.bf16 %v229, %v228
        %v277 = vpack.c.bf16 %v261, %v260
        %v278 = vld [vmem:[%s1] sm:$0xf]
        %v279 = vld [vmem:[%s1 + $0x4] sm:$0xf]
        %v282 = vunpack.c.l.b16 %v278
        %v283 = vunpack.c.l.b16 %v279
        %v284 = vpack.c.b16 %v283, %v282
        %vm286 = vcmask 130048
        %v288 = vsel %vm286, %v276, 0
        %v291 = vsel %vm286, %v277, 0
        %293 = vmatprep.subr.bf16.mxu0 0
        %294 = vmatpush1.bf16.msra.mxu0 %v284
        %295 = vmatprep.subr.bf16.mxu0 0
        %296 = vmatpush1.bf16.msra.mxu0 0
        %297 = vmatprep.subr.bf16.mxu0 0
        %298 = vmatpush1.bf16.msra.mxu0 0
        %299 = vmatprep.subr.bf16.mxu0 0
        %300 = vmatpush1.bf16.msra.mxu0 0
        %301 = vmatprep.subr.bf16.mxu0 0
        %302 = vmatpush1.bf16.msra.mxu0 0
        %303 = vmatprep.subr.bf16.mxu0 0
        %304 = vmatpush1.bf16.msra.mxu0 0
        %305 = vmatprep.subr.bf16.mxu0 0
        %306 = vmatpush1.bf16.msra.mxu0 0
        %307 = vmatprep.subr.bf16.mxu0 0
        %308 = vmatpush1.bf16.msra.mxu0 0
        %309 = vmatprep.subr.bf16.mxu0 0
        %310 = vmatpush1.bf16.msra.mxu0 0
        %311 = vmatprep.subr.bf16.mxu0 0
        %312 = vmatpush1.bf16.msra.mxu0 0
        %313 = vmatprep.subr.bf16.mxu0 0
        %314 = vmatpush1.bf16.msra.mxu0 0
        %315 = vmatprep.subr.bf16.mxu0 0
        %316 = vmatpush1.bf16.msra.mxu0 0
        %317 = vmatprep.subr.bf16.mxu0 0
        %318 = vmatpush1.bf16.msra.mxu0 0
        %319 = vmatprep.subr.bf16.mxu0 0
        %320 = vmatpush1.bf16.msra.mxu0 0
        %321 = vmatprep.subr.bf16.mxu0 0
        %322 = vmatpush1.bf16.msra.mxu0 0
        %323 = vmatprep.subr.bf16.mxu0 0
        %324 = vmatpush1.bf16.msra.mxu0 0
        %325 = vmatprep.mubr.bf16.mxu0 0
        %326 = vmatmul.mubr.bf16.gmra.mrb[0].mxu0 %v288
        %v327 = vpop.f32.mrb[0].mxu0
        %v328 = vadd.f32 0.0, %v327
        %v329 = vpop.f32.mrb[0].mxu0
        %v330 = vpop.f32.mrb[0].mxu0
        %v331 = vadd.f32 0.0, %v330
        %v332 = vpop.f32.mrb[0].mxu0
        %333 = vmatprep.mubr.bf16.mxu0 0
        %334 = vmatmul.mubr.bf16.gmra.mrb[0].mxu0 %v291
        %v335 = vpop.f32.mrb[0].mxu0
        %v336 = vadd.f32 0.0, %v335
        %v337 = vpop.f32.mrb[0].mxu0
        %v338 = vpop.f32.mrb[0].mxu0
        %v339 = vadd.f32 0.0, %v338
        %v340 = vpop.f32.mrb[0].mxu0
        %341 = vdwg.mxu0
        %342 = vxpose.xlu0.b32.start [1/16] %v328, 128
        %343 = vxpose.xlu0.b32.cont [2/16] %v331, 128
        %344 = vxpose.xlu0.b32.cont [3/16] 0.0, 128
        %345 = vxpose.xlu0.b32.cont [4/16] 0.0, 128
        %346 = vxpose.xlu0.b32.cont [5/16] 0.0, 128
        %347 = vxpose.xlu0.b32.cont [6/16] 0.0, 128
        %348 = vxpose.xlu0.b32.cont [7/16] 0.0, 128
        %349 = vxpose.xlu0.b32.cont [8/16] 0.0, 128
        %350 = vxpose.xlu0.b32.cont [9/16] 0.0, 128
        %351 = vxpose.xlu0.b32.cont [10/16] 0.0, 128
        %352 = vxpose.xlu0.b32.cont [11/16] 0.0, 128
        %353 = vxpose.xlu0.b32.cont [12/16] 0.0, 128
        %354 = vxpose.xlu0.b32.cont [13/16] 0.0, 128
        %355 = vxpose.xlu0.b32.cont [14/16] 0.0, 128
        %356 = vxpose.xlu0.b32.cont [15/16] 0.0, 128
        %357 = vxpose.xlu0.b32.end [16/16] 0.0, 128
        %v358 = vpop.trf.xlu0
        %v359 = vpop.trf.xlu0
        %v360 = vpop.trf.xlu0
        %v361 = vpop.trf.xlu0
        %v362 = vpop.trf.xlu0
        %v363 = vpop.trf.xlu0
        %v364 = vpop.trf.xlu0
        %v365 = vpop.trf.xlu0
        %v366 = vpop.trf.xlu0
        %v367 = vpop.trf.xlu0
        %v368 = vpop.trf.xlu0
        %v369 = vpop.trf.xlu0
        %v370 = vpop.trf.xlu0
        %v371 = vpop.trf.xlu0
        %v372 = vpop.trf.xlu0
        %v373 = vpop.trf.xlu0
        %374 = vxpose.xlu0.b32.start [1/16] %v336, 128
        %375 = vxpose.xlu0.b32.cont [2/16] %v339, 128
        %376 = vxpose.xlu0.b32.cont [3/16] 0.0, 128
        %377 = vxpose.xlu0.b32.cont [4/16] 0.0, 128
        %378 = vxpose.xlu0.b32.cont [5/16] 0.0, 128
        %379 = vxpose.xlu0.b32.cont [6/16] 0.0, 128
        %380 = vxpose.xlu0.b32.cont [7/16] 0.0, 128
        %381 = vxpose.xlu0.b32.cont [8/16] 0.0, 128
        %382 = vxpose.xlu0.b32.cont [9/16] 0.0, 128
        %383 = vxpose.xlu0.b32.cont [10/16] 0.0, 128
        %384 = vxpose.xlu0.b32.cont [11/16] 0.0, 128
        %385 = vxpose.xlu0.b32.cont [12/16] 0.0, 128
        %386 = vxpose.xlu0.b32.cont [13/16] 0.0, 128
        %387 = vxpose.xlu0.b32.cont [14/16] 0.0, 128
        %388 = vxpose.xlu0.b32.cont [15/16] 0.0, 128
        %389 = vxpose.xlu0.b32.end [16/16] 0.0, 128
        %v390 = vpop.trf.xlu0
        %v391 = vpop.trf.xlu0
        %v392 = vpop.trf.xlu0
        %v393 = vpop.trf.xlu0
        %v394 = vpop.trf.xlu0
        %v395 = vpop.trf.xlu0
        %v396 = vpop.trf.xlu0
        %v397 = vpop.trf.xlu0
        %v398 = vpop.trf.xlu0
        %v399 = vpop.trf.xlu0
        %v400 = vpop.trf.xlu0
        %v401 = vpop.trf.xlu0
        %v402 = vpop.trf.xlu0
        %v403 = vpop.trf.xlu0
        %v404 = vpop.trf.xlu0
        %v405 = vpop.trf.xlu0
        %v406 = vpack.c.bf16 %v359, %v358
        %v407 = vpack.c.bf16 %v361, %v360
        %v408 = vpack.c.bf16 %v391, %v390
        %v409 = vpack.c.bf16 %v393, %v392
        %v410 = vld [vmem:[%s2] sm:$0xf]
        %v411 = vld [vmem:[%s2 + $0x4] sm:$0xf]
        %v414 = vunpack.c.l.b16 %v410
        %v415 = vunpack.c.l.b16 %v411
        %v416 = vpack.c.b16 %v415, %v414
        %v419 = vsel %vm286, %v406, 0
        %v422 = vsel %vm286, %v407, 0
        %v425 = vsel %vm286, %v408, 0
        %v428 = vsel %vm286, %v409, 0
        %430 = vmatprep.subr.bf16.mxu0 0
        %431 = vmatpush1.bf16.msra.mxu0 %v416
        %432 = vmatprep.subr.bf16.mxu0 0
        %433 = vmatpush1.bf16.msra.mxu0 0
        %434 = vmatprep.subr.bf16.mxu0 0
        %435 = vmatpush1.bf16.msra.mxu0 0
        %436 = vmatprep.subr.bf16.mxu0 0
        %437 = vmatpush1.bf16.msra.mxu0 0
        %438 = vmatprep.subr.bf16.mxu0 0
        %439 = vmatpush1.bf16.msra.mxu0 0
        %440 = vmatprep.subr.bf16.mxu0 0
        %441 = vmatpush1.bf16.msra.mxu0 0
        %442 = vmatprep.subr.bf16.mxu0 0
        %443 = vmatpush1.bf16.msra.mxu0 0
        %444 = vmatprep.subr.bf16.mxu0 0
        %445 = vmatpush1.bf16.msra.mxu0 0
        %446 = vmatprep.subr.bf16.mxu0 0
        %447 = vmatpush1.bf16.msra.mxu0 0
        %448 = vmatprep.subr.bf16.mxu0 0
        %449 = vmatpush1.bf16.msra.mxu0 0
        %450 = vmatprep.subr.bf16.mxu0 0
        %451 = vmatpush1.bf16.msra.mxu0 0
        %452 = vmatprep.subr.bf16.mxu0 0
        %453 = vmatpush1.bf16.msra.mxu0 0
        %454 = vmatprep.subr.bf16.mxu0 0
        %455 = vmatpush1.bf16.msra.mxu0 0
        %456 = vmatprep.subr.bf16.mxu0 0
        %457 = vmatpush1.bf16.msra.mxu0 0
        %458 = vmatprep.subr.bf16.mxu0 0
        %459 = vmatpush1.bf16.msra.mxu0 0
        %460 = vmatprep.subr.bf16.mxu0 0
        %461 = vmatpush1.bf16.msra.mxu0 0
        %462 = vmatprep.mubr.bf16.mxu0 0
        %463 = vmatmul.mubr.bf16.gmra.mrb[0].mxu0 %v419
        %v464 = vpop.f32.mrb[0].mxu0
        %v465 = vadd.f32 0.0, %v464
        %v466 = vpop.f32.mrb[0].mxu0
        %v467 = vpop.f32.mrb[0].mxu0
        %v468 = vadd.f32 0.0, %v467
        %v469 = vpop.f32.mrb[0].mxu0
        %470 = vmatprep.mubr.bf16.mxu0 0
        %471 = vmatmul.mubr.bf16.gmra.mrb[0].mxu0 %v422
        %v472 = vpop.f32.mrb[0].mxu0
        %v473 = vadd.f32 0.0, %v472
        %v474 = vpop.f32.mrb[0].mxu0
        %v475 = vpop.f32.mrb[0].mxu0
        %v476 = vadd.f32 0.0, %v475
        %v477 = vpop.f32.mrb[0].mxu0
        %478 = vmatprep.mubr.bf16.mxu0 0
        %479 = vmatmul.mubr.bf16.gmra.mrb[0].mxu0 %v425
        %v480 = vpop.f32.mrb[0].mxu0
        %v481 = vadd.f32 0.0, %v480
        %v482 = vpop.f32.mrb[0].mxu0
        %v483 = vpop.f32.mrb[0].mxu0
        %v484 = vadd.f32 0.0, %v483
        %v485 = vpop.f32.mrb[0].mxu0
        %486 = vmatprep.mubr.bf16.mxu0 0
        %487 = vmatmul.mubr.bf16.gmra.mrb[0].mxu0 %v428
        %v488 = vpop.f32.mrb[0].mxu0
        %v489 = vadd.f32 0.0, %v488
        %v490 = vpop.f32.mrb[0].mxu0
        %v491 = vpop.f32.mrb[0].mxu0
        %v492 = vadd.f32 0.0, %v491
        %v493 = vpop.f32.mrb[0].mxu0
        %494 = vdwg.mxu0
        %vm495 = vcmask 261120
        %496 = vst.msk [vmem:[%s190] sm:$0xff] %vm495, %v465
        %497 = vst.msk [vmem:[%s190 + $0x8] sm:$0xff] %vm495, %v468
        %498 = vst.msk [vmem:[%s190 + $0x10] sm:$0xff] %vm495, %v473
        %499 = vst.msk [vmem:[%s190 + $0x18] sm:$0xff] %vm495, %v476
        %500 = vst.msk [vmem:[%s190 + $0x20] sm:$0xff] %vm495, %v481
        %501 = vst.msk [vmem:[%s190 + $0x28] sm:$0xff] %vm495, %v484
        %502 = vst.msk [vmem:[%s190 + $0x30] sm:$0xff] %vm495, %v489
        %503 = vst.msk [vmem:[%s190 + $0x38] sm:$0xff] %vm495, %v492
        %s504 = sand.u32 %s109, 1
        %s505 = scalar_lea.sflag [#allocation3], %s504
        %s506 = sand.u32 %s109, 1
        %s507 = smul.addr %s506, 64
        %s508 = scalar_lea.vmem [#allocation2], %s507
        // Predicated region
        $region33: #{_lambda_.3} parent=31 // pred_check
          %p509 = pneg %p119
        $region34: #{_lambda_.3} parent=31 // pred_check_branch
          %511 = sbr.rel (%p509) target = $region36
        $region35: #{_lambda_.3} parent=31 // pred_region
          %s512 = smul.u32 2, %s22
          %s514 = ssub.s32 1024, 1024
          %515 = vsyncadd %s505, %s514
          %s516 = smul.addr %s512, 4
          %s517 = smul.addr %s21, 32
          %s518 = sadd.s32 %s516, %s517
          %s519 = smul.addr %s518, 128
          %s520 = scalar_lea.hbm %s3, %s519
          %s521 = sshll.u32 %s508, 4
          %s522 = int_to_ptr.vmem [resolvable:$true] %s521
          %527 = dma.vmem_to_hbm [thread:$0]  %s522, 1024, %s520, %s505, 128, 128, 8
        $region36: #{_lambda_.3} parent=31 // pred_fallthru
          _
      $region32: #{_lambda_.3} parent=5 // pred_fallthru
        _
      %p528 = scmp.le.s32.totalorder 2, %s12
      // Predicated region
      $region37: #{_lambda_.3} parent=5 // pred_check
        %p529 = pneg %p528
      $region38: #{_lambda_.3} parent=5 // pred_check_branch
        %531 = sbr.rel (%p529) target = $region40
      $region39: #{_lambda_.3} parent=5 // pred_region
        %s532 = ssub.s32 %s12, 2
        // Predicated region
        $region41: #{_lambda_.3} parent=39 // pred_check
          %p533 = pneg %p125
        $region42: #{_lambda_.3} parent=39 // pred_check_branch
          %535 = sbr.rel (%p533) target = $region44
        $region43: #{_lambda_.3} parent=39 // pred_region
          %s536 = sand.u32 %s110, 1
          %s537 = scalar_lea.sflag [#allocation3], %s536
          %s538 = sand.u32 %s110, 1
          %s539 = smul.addr %s538, 64
          %s540 = scalar_lea.vmem [#allocation2], %s539
          %541 = dma.done %s537, 1024
        $region44: #{_lambda_.3} parent=39 // pred_fallthru
          _
      $region40: #{_lambda_.3} parent=5 // pred_fallthru
        _
    $region6: #{_lambda_.3} parent=1 // loop_footer
      %s16 = sadd.s32 1, %s12
    $region7: #{_lambda_.3} parent=1 // loop_footer_branch
      %11 = sbr.rel target = $region3
    $region8: #{_lambda_.3} parent=1 // loop_exit
      _
    %542 = vsyncpa [#allocation3], 1
    %s543 = scalar_lea.sflag [#allocation3], 1
    %544 = vsyncpa %s543, 1

</llo_original>
